<compile_context>
chip_gen: v6e
topology: v6e:2x2x1
jax: 0.10.0
libtpu: 0.0.40
codegen_flags: <defaults>
</compile_context>

<pallas_src>
import functools

import jax
import jax.numpy as jnp
from jax.experimental import pallas as pl
from jax.experimental.pallas import tpu as pltpu


def _sum2d(x):
    # Full reduction to a (1, 1) value via lane-then-sublane keepdims reduces.
    return jnp.sum(jnp.sum(x, axis=1, keepdims=True), axis=0, keepdims=True)


def _max2d(x):
    return jnp.max(jnp.max(x, axis=1, keepdims=True), axis=0, keepdims=True)


def _softmax_loss_kernel(scores_ref,
                         colsum_out, acc_out, gmax_out,
                         colsum_sc, gmax_sc, acc_sc,
                         *, smooth, tm, steps, num_row_blocks):
    c = pl.program_id(0)           # split index (parallel; a core on v7x)
    i = pl.program_id(1)           # row-tile step within the split (reduction)
    last = pl.num_programs(1) - 1

    @pl.when(i == 0)
    def _init():
        colsum_sc[...] = jnp.zeros_like(colsum_sc)
        gmax_sc[...] = jnp.full((1, 1), -jnp.inf, jnp.float32)
        acc_sc[...] = jnp.zeros_like(acc_sc)

    # Per-row max taken on the raw tile (scaling by positive `smooth` is
    # monotone), so the scaled f32 tile need not stay live across the max pass.
    raw = scores_ref[...]
    m_row = jnp.max(raw, axis=1, keepdims=True).astype(jnp.float32) * smooth   # (TM,1)

    # One exp pass per element, relative to the exact per-row max (robust for
    # arbitrary logits, not just bounded cosine scores).
    p = jnp.exp(scores_ref[...].astype(jnp.float32) * smooth - m_row)          # (TM,N)
    row_sum = jnp.sum(p, axis=1, keepdims=True)                                # (TM,1)

    # Diagonal logits (labels = arange(N)) sliced out of the already-resident
    # row tile: global row block b owns columns [b*TM, (b+1)*TM). No second
    # HBM stream / BlockSpec needed.
    if num_row_blocks == 1:
        dblk = scores_ref[...].astype(jnp.float32) * smooth                    # (N,N)
    else:
        start = pl.multiple_of((c * steps + i) * tm, 128)                      # lane-aligned
        dblk = scores_ref[:, pl.ds(start, tm)].astype(jnp.float32) * smooth    # (TM,TM)
    rid = jax.lax.broadcasted_iota(jnp.int32, dblk.shape, 0)
    cid = jax.lax.broadcasted_iota(jnp.int32, dblk.shape, 1)
    diag = jnp.sum(jnp.where(rid == cid, dblk, 0.0), axis=1, keepdims=True)    # (TM,1)

    # Row-direction LSE and the -2*diag term folded into ONE scalar accumulator.
    acc_sc[...] += _sum2d(jnp.log(row_sum) + m_row - 2.0 * diag)

    # Column-direction online sum-exp: lane-dense (1, N) accumulator kept
    # relative to the running split max gmax. (If XLU/VPU ever binds after the
    # DMA is hidden, `tile_col` can be routed through the idle MXU as
    # dot(w.T, p); kept on the VPU here for simplicity.)
    m_tile = _max2d(m_row)                                                     # (1,1)
    w = jnp.exp(m_row - m_tile)                                                # (TM,1)
    tile_col = jnp.sum(p * w, axis=0, keepdims=True)                           # (1,N)
    old_max = gmax_sc[...]
    new_max = jnp.maximum(old_max, m_tile)
    colsum_sc[...] = (colsum_sc[...] * jnp.exp(old_max - new_max)
                      + tile_col * jnp.exp(m_tile - new_max))
    gmax_sc[...] = new_max

    @pl.when(i == last)
    def _writeout():
        colsum_out[...] = colsum_sc[...].reshape(colsum_out.shape)
        acc_out[...] = acc_sc[...].reshape(acc_out.shape)
        gmax_out[...] = gmax_sc[...].reshape(gmax_out.shape)


def _vmem_capacity_bytes():
    try:
        return int(pltpu.get_tpu_info().vmem_capacity_bytes)
    except Exception:
        return 64 * 1024 * 1024            # conservative (v7x per-core VMEM)


def _working_set_bytes(n, tm, itemsize, nbuf):
    return (nbuf * tm * n * itemsize       # pipelined input row-tile buffers
            + 2 * tm * n * 4               # f32 intermediates (exp input/output)
            + tm * tm * 4                  # upcast diagonal block
            + 16 * n                       # (1,N) column accumulator + outputs
            + (1 << 16))                   # scalars / slack


def _choose_block_rows(n, itemsize, budget):
    if n % 128 != 0:
        # TODO(synk): pad irregular N up to a multiple of 128 (mask pads with
        # -inf) to keep the DMA pipeline instead of one resident block.
        return n
    for tm in (512, 256, 128):
        if n % tm == 0 and _working_set_bytes(n, tm, itemsize, 2) <= budget:
            return tm
    # TODO(synk): add a column-tiled (flash-style) path for very large N.
    raise ValueError(
        f"scores of size {n}x{n} exceed the VMEM budget ({budget} bytes) even "
        f"with a 128-row tile; a column-tiled path is required.")


def softmax_loss(scores, smooth=15.0, block_rows=None, num_splits=None):
    """Pallas implementation of SoftmaxLoss.forward. Returns a scalar f32."""
    n, n2 = scores.shape
    assert n == n2, "scores must be square [N, N]"
    assert smooth > 0, "smooth must be positive"
    itemsize = jnp.dtype(scores.dtype).itemsize

    cap = _vmem_capacity_bytes()
    budget = int(cap * 0.70)               # ~45 MiB on v7x, ~90 MiB on v5e/v6e

    tm = block_rows if block_rows is not None else _choose_block_rows(n, itemsize, budget)
    assert n % tm == 0, "block_rows must divide N"
    grid_rows = n // tm
    if grid_rows > 1:
        assert tm % 128 == 0, "tiled path needs 128-aligned row tiles"

    if num_splits is None:
        num_splits = 2 if (grid_rows >= 2 and grid_rows % 2 == 0) else 1
    assert grid_rows % num_splits == 0
    steps = grid_rows // num_splits

    # Triple-buffer the row tile when there are enough steps to benefit and the
    # VMEM budget allows it (biggest win on v5e's low HBM bandwidth).
    nbuf = 3 if (steps >= 3 and _working_set_bytes(n, tm, itemsize, 3) <= budget) else 2

    row_map = lambda c, i: (c * steps + i, 0)
    if nbuf > 2:
        try:
            row_spec = pl.BlockSpec((tm, n), row_map, pipeline_mode=pl.Buffered(nbuf))
        except TypeError:                   # older BlockSpec without pipeline_mode
            row_spec = pl.BlockSpec((tm, n), row_map)
    else:
        row_spec = pl.BlockSpec((tm, n), row_map)

    kernel = functools.partial(_softmax_loss_kernel, smooth=float(smooth),
                               tm=tm, steps=steps, num_row_blocks=grid_rows)

    colsum, acc, gmax = pl.pallas_call(
        kernel,
        out_shape=(
            jax.ShapeDtypeStruct((num_splits, 1, n), jnp.float32),  # per-split col sum-exp
            jax.ShapeDtypeStruct((num_splits, 1, 1), jnp.float32),  # per-split rowLSE-2diag
            jax.ShapeDtypeStruct((num_splits, 1, 1), jnp.float32),  # per-split max
        ),
        grid_spec=pltpu.PrefetchScalarGridSpec(
            num_scalar_prefetch=0,
            grid=(num_splits, steps),
            in_specs=[row_spec],
            out_specs=[
                pl.BlockSpec((1, 1, n), lambda c, i: (c, 0, 0)),
                pl.BlockSpec((1, 1, 1), lambda c, i: (c, 0, 0)),
                pl.BlockSpec((1, 1, 1), lambda c, i: (c, 0, 0)),
            ],
            scratch_shapes=[
                pltpu.VMEM((1, n), jnp.float32),   # running column sum-exp
                pltpu.VMEM((1, 1), jnp.float32),   # running split max
                pltpu.VMEM((1, 1), jnp.float32),   # sum(rowLSE) - 2*sum(diag)
            ],
        ),
        compiler_params=pltpu.CompilerParams(
            dimension_semantics=("parallel", "arbitrary"),
            vmem_limit_bytes=int(cap * 0.85),
        ),
    )(scores)

    # Cheap wrapper-side combine of the per-split partials (C x N floats).
    colsum = colsum[:, 0, :]                                  # (C, N)
    acc = acc[:, 0, 0]                                        # (C,)
    gmax = gmax[:, 0, 0]                                      # (C,)
    g = jnp.max(gmax)
    total_col = jnp.sum(colsum * jnp.exp(gmax - g)[:, None], axis=0)   # (N,)
    col_lse_sum = jnp.sum(jnp.log(total_col)) + n * g
    return (jnp.sum(acc) + col_lse_sum) / n


def _reference_softmax_loss(scores, smooth=15.0):
    """Plain-JAX reference (matches torch CrossEntropyLoss semantics)."""
    s = scores.astype(jnp.float32) * smooth
    lse_row = jax.scipy.special.logsumexp(s, axis=1)
    lse_col = jax.scipy.special.logsumexp(s, axis=0)
    diag = jnp.diagonal(s)
    return jnp.mean(lse_row - diag) + jnp.mean(lse_col - diag)


if __name__ == "__main__":
    key = jax.random.PRNGKey(0)

    # 1) Tiled path with two splits: N=256, TM=128 -> grid (2, 1), exercises
    #    the per-split partials + wrapper combine and the diag lane-slice.
    n = 256
    scores = jax.random.uniform(key, (n, n), jnp.float32, minval=-1.0, maxval=1.0)
    want = _reference_softmax_loss(scores, smooth=15.0)
    got = jax.block_until_ready(softmax_loss(scores, smooth=15.0, block_rows=128))
    assert jnp.allclose(got, want, rtol=1e-4, atol=1e-3), (got, want)

    # 2) Default tile choice (single resident 256-row tile, one split).
    got = jax.block_until_ready(softmax_loss(scores, smooth=15.0))
    assert jnp.allclose(got, want, rtol=1e-4, atol=1e-3), (got, want)

    # 3) bf16 scores (halves HBM traffic); kernel upcasts in VMEM.
    scores_bf16 = scores.astype(jnp.bfloat16)
    want_bf16 = _reference_softmax_loss(scores_bf16, smooth=15.0)
    got = jax.block_until_ready(softmax_loss(scores_bf16, smooth=15.0, block_rows=128))
    assert jnp.allclose(got, want_bf16, rtol=1e-4, atol=1e-3), (got, want_bf16)

    # 4) Deeper grid: N=768, TM=128 -> grid (2, 3); exercises the online column
    #    accumulator across steps and the Buffered(3) input pipeline.
    n_big = 768
    scores_big = jax.random.uniform(jax.random.PRNGKey(2), (n_big, n_big),
                                    jnp.float32, minval=-1.0, maxval=1.0)
    want_big = _reference_softmax_loss(scores_big, smooth=15.0)
    got = jax.block_until_ready(softmax_loss(scores_big, smooth=15.0, block_rows=128))
    assert jnp.allclose(got, want_big, rtol=1e-4, atol=1e-3), (got, want_big)

    # 5) Small / irregular N fallback: whole matrix as a single block.
    n_small = 8
    scores_small = jax.random.uniform(jax.random.PRNGKey(1), (n_small, n_small),
                                      jnp.float32, minval=-1.0, maxval=1.0)
    want_small = _reference_softmax_loss(scores_small, smooth=15.0)
    got = jax.block_until_ready(softmax_loss(scores_small, smooth=15.0))
    assert jnp.allclose(got, want_small, rtol=1e-4, atol=1e-4), (got, want_small)

    print("KERNEL_OK")
</pallas_src>

<mosaic_0001>
module attributes {stable_mosaic.version = 11 : i64} {
  func.func @_softmax_loss_kernel(%arg0: i32, %arg1: i32, %arg2: memref<128x256xf32, #tpu.memory_space<vmem>>, %arg3: memref<1x1x256xf32, #tpu.memory_space<vmem>>, %arg4: memref<1x1x1xf32, #tpu.memory_space<vmem>>, %arg5: memref<1x1x1xf32, #tpu.memory_space<vmem>>, %arg6: memref<1x256xf32, #tpu.memory_space<vmem>>, %arg7: memref<1x1xf32, #tpu.memory_space<vmem>>, %arg8: memref<1x1xf32, #tpu.memory_space<vmem>>) attributes {dimension_semantics = [#tpu.dimension_semantics<parallel>, #tpu.dimension_semantics<arbitrary>], iteration_bounds = array<i64: 2, 1>, scalar_prefetch = 0 : i64, scratch_operands = 3 : i64, tpu.core_type = #tpu.core_type<tc>, window_params = [{transform_indices = @transform_0, window_bounds = array<i64: 128, 256>}, {transform_indices = @transform_1, window_bounds = array<i64: 1, 1, 256>}, {transform_indices = @transform_2, window_bounds = array<i64: 1, 1, 1>}, {transform_indices = @transform_3, window_bounds = array<i64: 1, 1, 1>}]} {
    %c0_i32 = arith.constant 0 : i32
    %0 = arith.cmpi eq, %arg1, %c0_i32 : i32
    %1 = arith.extui %0 : i1 to i32
    %c0_i32_0 = arith.constant 0 : i32
    %2 = arith.cmpi ne, %1, %c0_i32_0 : i32
    scf.if %2 {
      %cst_31 = arith.constant 0.000000e+00 : f32
      %71 = vector.broadcast %cst_31 : f32 to vector<1x256xf32>
      %c0_32 = arith.constant 0 : index
      %c0_33 = arith.constant 0 : index
      %72 = vector.load %arg6[%c0_32, %c0_33] : memref<1x256xf32, #tpu.memory_space<vmem>>, vector<1x256xf32>
      tpu.vector_store %arg6[%c0_32, %c0_33], %71 {strides = array<i32>} : memref<1x256xf32, #tpu.memory_space<vmem>>, vector<1x256xf32>,
      %cst_34 = arith.constant 0xFF800000 : f32
      %73 = vector.broadcast %cst_34 : f32 to vector<1x1xf32>
      %c0_35 = arith.constant 0 : index
      %c0_36 = arith.constant 0 : index
      %74 = vector.load %arg7[%c0_35, %c0_36] : memref<1x1xf32, #tpu.memory_space<vmem>>, vector<1x1xf32>
      tpu.vector_store %arg7[%c0_35, %c0_36], %73 {strides = array<i32>} : memref<1x1xf32, #tpu.memory_space<vmem>>, vector<1x1xf32>,
      %cst_37 = arith.constant 0.000000e+00 : f32
      %75 = vector.broadcast %cst_37 : f32 to vector<1x1xf32>
      %c0_38 = arith.constant 0 : index
      %c0_39 = arith.constant 0 : index
      %76 = vector.load %arg8[%c0_38, %c0_39] : memref<1x1xf32, #tpu.memory_space<vmem>>, vector<1x1xf32>
      tpu.vector_store %arg8[%c0_38, %c0_39], %75 {strides = array<i32>} : memref<1x1xf32, #tpu.memory_space<vmem>>, vector<1x1xf32>,
    } else {
    }
    %c0 = arith.constant 0 : index
    %c0_1 = arith.constant 0 : index
    %3 = vector.load %arg2[%c0, %c0_1] : memref<128x256xf32, #tpu.memory_space<vmem>>, vector<128x256xf32>
    %cst = arith.constant dense<0xFF800000> : vector<128xf32>
    %4 = vector.multi_reduction <maximumf>, %3, %cst [1] : vector<128x256xf32> to vector<128xf32>
    %5 = vector.shape_cast %4 : vector<128xf32> to vector<128x1xf32>
    %cst_2 = arith.constant 1.500000e+01 : f32
    %6 = vector.broadcast %cst_2 : f32 to vector<128x1xf32>
    %7 = arith.mulf %5, %6 : vector<128x1xf32>
    %c0_3 = arith.constant 0 : index
    %c0_4 = arith.constant 0 : index
    %8 = vector.load %arg2[%c0_3, %c0_4] : memref<128x256xf32, #tpu.memory_space<vmem>>, vector<128x256xf32>
    %cst_5 = arith.constant 1.500000e+01 : f32
    %9 = vector.broadcast %cst_5 : f32 to vector<128x256xf32>
    %10 = arith.mulf %8, %9 : vector<128x256xf32>
    %11 = vector.broadcast %7 : vector<128x1xf32> to vector<128x256xf32>
    %12 = arith.subf %10, %11 : vector<128x256xf32>
    %13 = math.exp %12 : vector<128x256xf32>
    %cst_6 = arith.constant dense<0.000000e+00> : vector<128xf32>
    %14 = vector.multi_reduction <add>, %13, %cst_6 [1] : vector<128x256xf32> to vector<128xf32>
    %15 = vector.shape_cast %14 : vector<128xf32> to vector<128x1xf32>
    %c1_i32 = arith.constant 1 : i32
    %16 = arith.muli %arg0, %c1_i32 : i32
    %17 = arith.addi %16, %arg1 : i32
    %c128_i32 = arith.constant 128 : i32
    %18 = arith.muli %17, %c128_i32 : i32
    %19 = tpu.assume_multiple %18, 128 : i32
    %c0_7 = arith.constant 0 : index
    %20 = arith.index_cast %19 : i32 to index
    %21 = vector.load %arg2[%c0_7, %20] : memref<128x256xf32, #tpu.memory_space<vmem>>, vector<128x128xf32>
    %cst_8 = arith.constant 1.500000e+01 : f32
    %22 = vector.broadcast %cst_8 : f32 to vector<128x128xf32>
    %23 = arith.mulf %21, %22 : vector<128x128xf32>
    %24 = tpu.iota {dimensions = array<i32: 0>} : vector<128x128xi32>
    %25 = tpu.iota {dimensions = array<i32: 1>} : vector<128x128xi32>
    %26 = arith.cmpi eq, %24, %25 : vector<128x128xi32>
    %cst_9 = arith.constant 0.000000e+00 : f32
    %27 = vector.broadcast %cst_9 : f32 to vector<128x128xf32>
    %28 = arith.select %26, %23, %27 : vector<128x128xi1>, vector<128x128xf32>
    %cst_10 = arith.constant dense<0.000000e+00> : vector<128xf32>
    %29 = vector.multi_reduction <add>, %28, %cst_10 [1] : vector<128x128xf32> to vector<128xf32>
    %30 = vector.shape_cast %29 : vector<128xf32> to vector<128x1xf32>
    %c0_11 = arith.constant 0 : index
    %c0_12 = arith.constant 0 : index
    %31 = vector.load %arg8[%c0_11, %c0_12] : memref<1x1xf32, #tpu.memory_space<vmem>>, vector<1x1xf32>
    %32 = math.log %15 : vector<128x1xf32>
    %33 = arith.addf %32, %7 : vector<128x1xf32>
    %cst_13 = arith.constant 2.000000e+00 : f32
    %34 = vector.broadcast %cst_13 : f32 to vector<128x1xf32>
    %35 = arith.mulf %34, %30 : vector<128x1xf32>
    %36 = arith.subf %33, %35 : vector<128x1xf32>
    %cst_14 = arith.constant dense<0.000000e+00> : vector<128xf32>
    %37 = vector.multi_reduction <add>, %36, %cst_14 [1] : vector<128x1xf32> to vector<128xf32>
    %38 = vector.shape_cast %37 : vector<128xf32> to vector<128x1xf32>
    %cst_15 = arith.constant dense<0.000000e+00> : vector<1xf32>
    %39 = vector.multi_reduction <add>, %38, %cst_15 [0] : vector<128x1xf32> to vector<1xf32>
    %40 = vector.shape_cast %39 : vector<1xf32> to vector<1x1xf32>
    %41 = arith.addf %31, %40 : vector<1x1xf32>
    %c0_16 = arith.constant 0 : index
    %c0_17 = arith.constant 0 : index
    %42 = vector.load %arg8[%c0_16, %c0_17] : memref<1x1xf32, #tpu.memory_space<vmem>>, vector<1x1xf32>
    tpu.vector_store %arg8[%c0_16, %c0_17], %41 {strides = array<i32>} : memref<1x1xf32, #tpu.memory_space<vmem>>, vector<1x1xf32>,
    %cst_18 = arith.constant dense<0xFF800000> : vector<128xf32>
    %43 = vector.multi_reduction <maximumf>, %7, %cst_18 [1] : vector<128x1xf32> to vector<128xf32>
    %44 = vector.shape_cast %43 : vector<128xf32> to vector<128x1xf32>
    %cst_19 = arith.constant dense<0xFF800000> : vector<1xf32>
    %45 = vector.multi_reduction <maximumf>, %44, %cst_19 [0] : vector<128x1xf32> to vector<1xf32>
    %46 = vector.shape_cast %45 : vector<1xf32> to vector<1x1xf32>
    %47 = vector.broadcast %46 : vector<1x1xf32> to vector<128x1xf32>
    %48 = arith.subf %7, %47 : vector<128x1xf32>
    %49 = math.exp %48 : vector<128x1xf32>
    %50 = vector.broadcast %49 : vector<128x1xf32> to vector<128x256xf32>
    %51 = arith.mulf %13, %50 : vector<128x256xf32>
    %cst_20 = arith.constant dense<0.000000e+00> : vector<256xf32>
    %52 = vector.multi_reduction <add>, %51, %cst_20 [0] : vector<128x256xf32> to vector<256xf32>
    %53 = vector.shape_cast %52 : vector<256xf32> to vector<1x256xf32>
    %c0_21 = arith.constant 0 : index
    %c0_22 = arith.constant 0 : index
    %54 = vector.load %arg7[%c0_21, %c0_22] : memref<1x1xf32, #tpu.memory_space<vmem>>, vector<1x1xf32>
    %55 = arith.maximumf %54, %46 : vector<1x1xf32>
    %c0_23 = arith.constant 0 : index
    %c0_24 = arith.constant 0 : index
    %56 = vector.load %arg6[%c0_23, %c0_24] : memref<1x256xf32, #tpu.memory_space<vmem>>, vector<1x256xf32>
    %57 = arith.subf %54, %55 : vector<1x1xf32>
    %58 = math.exp %57 : vector<1x1xf32>
    %59 = vector.broadcast %58 : vector<1x1xf32> to vector<1x256xf32>
    %60 = arith.mulf %56, %59 : vector<1x256xf32>
    %61 = arith.subf %46, %55 : vector<1x1xf32>
    %62 = math.exp %61 : vector<1x1xf32>
    %63 = vector.broadcast %62 : vector<1x1xf32> to vector<1x256xf32>
    %64 = arith.mulf %53, %63 : vector<1x256xf32>
    %65 = arith.addf %60, %64 : vector<1x256xf32>
    %c0_25 = arith.constant 0 : index
    %c0_26 = arith.constant 0 : index
    %66 = vector.load %arg6[%c0_25, %c0_26] : memref<1x256xf32, #tpu.memory_space<vmem>>, vector<1x256xf32>
    tpu.vector_store %arg6[%c0_25, %c0_26], %65 {strides = array<i32>} : memref<1x256xf32, #tpu.memory_space<vmem>>, vector<1x256xf32>,
    %c0_27 = arith.constant 0 : index
    %c0_28 = arith.constant 0 : index
    %67 = vector.load %arg7[%c0_27, %c0_28] : memref<1x1xf32, #tpu.memory_space<vmem>>, vector<1x1xf32>
    tpu.vector_store %arg7[%c0_27, %c0_28], %55 {strides = array<i32>} : memref<1x1xf32, #tpu.memory_space<vmem>>, vector<1x1xf32>,
    %c0_i32_29 = arith.constant 0 : i32
    %68 = arith.cmpi eq, %arg1, %c0_i32_29 : i32
    %69 = arith.extui %68 : i1 to i32
    %c0_i32_30 = arith.constant 0 : i32
    %70 = arith.cmpi ne, %69, %c0_i32_30 : i32
    scf.if %70 {
      %c0_31 = arith.constant 0 : index
      %c0_32 = arith.constant 0 : index
      %71 = vector.load %arg6[%c0_31, %c0_32] : memref<1x256xf32, #tpu.memory_space<vmem>>, vector<1x256xf32>
      %72 = vector.shape_cast %71 : vector<1x256xf32> to vector<1x1x256xf32>
      %c0_33 = arith.constant 0 : index
      %c0_34 = arith.constant 0 : index
      %c0_35 = arith.constant 0 : index
      %73 = vector.load %arg3[%c0_33, %c0_34, %c0_35] : memref<1x1x256xf32, #tpu.memory_space<vmem>>, vector<1x1x256xf32>
      tpu.vector_store %arg3[%c0_33, %c0_34, %c0_35], %72 {strides = array<i32>} : memref<1x1x256xf32, #tpu.memory_space<vmem>>, vector<1x1x256xf32>,
      %c0_36 = arith.constant 0 : index
      %c0_37 = arith.constant 0 : index
      %74 = vector.load %arg8[%c0_36, %c0_37] : memref<1x1xf32, #tpu.memory_space<vmem>>, vector<1x1xf32>
      %75 = vector.shape_cast %74 : vector<1x1xf32> to vector<1x1x1xf32>
      %c0_38 = arith.constant 0 : index
      %c0_39 = arith.constant 0 : index
      %c0_40 = arith.constant 0 : index
      %76 = vector.load %arg4[%c0_38, %c0_39, %c0_40] : memref<1x1x1xf32, #tpu.memory_space<vmem>>, vector<1x1x1xf32>
      tpu.vector_store %arg4[%c0_38, %c0_39, %c0_40], %75 {strides = array<i32>} : memref<1x1x1xf32, #tpu.memory_space<vmem>>, vector<1x1x1xf32>,
      %c0_41 = arith.constant 0 : index
      %c0_42 = arith.constant 0 : index
      %77 = vector.load %arg7[%c0_41, %c0_42] : memref<1x1xf32, #tpu.memory_space<vmem>>, vector<1x1xf32>
      %78 = vector.shape_cast %77 : vector<1x1xf32> to vector<1x1x1xf32>
      %c0_43 = arith.constant 0 : index
      %c0_44 = arith.constant 0 : index
      %c0_45 = arith.constant 0 : index
      %79 = vector.load %arg5[%c0_43, %c0_44, %c0_45] : memref<1x1x1xf32, #tpu.memory_space<vmem>>, vector<1x1x1xf32>
      tpu.vector_store %arg5[%c0_43, %c0_44, %c0_45], %78 {strides = array<i32>} : memref<1x1x1xf32, #tpu.memory_space<vmem>>, vector<1x1x1xf32>,
    } else {
    }
    return
  }
  func.func @transform_0(%arg0: i32, %arg1: i32) -> (i32, i32) {
    %c1_i32 = arith.constant 1 : i32
    %0 = arith.muli %arg0, %c1_i32 : i32
    %1 = arith.addi %0, %arg1 : i32
    %c0_i32 = arith.constant 0 : i32
    %c0_i32_0 = arith.constant 0 : i32
    return %1, %c0_i32 : i32, i32
  }
  func.func @transform_1(%arg0: i32, %arg1: i32) -> (i32, i32, i32) {
    %c0_i32 = arith.constant 0 : i32
    %c0_i32_0 = arith.constant 0 : i32
    %c0_i32_1 = arith.constant 0 : i32
    return %arg0, %c0_i32, %c0_i32_0 : i32, i32, i32
  }
  func.func @transform_2(%arg0: i32, %arg1: i32) -> (i32, i32, i32) {
    %c0_i32 = arith.constant 0 : i32
    %c0_i32_0 = arith.constant 0 : i32
    %c0_i32_1 = arith.constant 0 : i32
    return %arg0, %c0_i32, %c0_i32_0 : i32, i32, i32
  }
  func.func @transform_3(%arg0: i32, %arg1: i32) -> (i32, i32, i32) {
    %c0_i32 = arith.constant 0 : i32
    %c0_i32_0 = arith.constant 0 : i32
    %c0_i32_1 = arith.constant 0 : i32
    return %arg0, %c0_i32, %c0_i32_0 : i32, i32, i32
  }
}

</mosaic_0001>

<llo_original>
// kernel: tpu_custom_call.1
$region0: #{tpu_custom_call.1}
  #allocation0 [shape = 'u32[]', space=smem, size = 0x4, offset = 0x4, fixed_abs, tag = 'smem constant byte address 0x4 - core index']
  #allocation1 [shape = 'u32[144,128]{1,0:T(1,128)}', space=vmem, size = 0x12000, scoped, tag = 'internal scratch']
  #allocation2 [shape = 'f32[1,256]{1,0:T(1,128)}', space=vmem, size = 0x400, scoped, tag = 'scratch operand']
  #allocation3 [shape = 'f32[1,1]{1,0:T(1,128)}', space=vmem, size = 0x200, scoped, tag = 'scratch operand']
  #allocation4 [shape = 'f32[1,1]{1,0:T(1,128)}', space=vmem, size = 0x200, scoped, tag = 'scratch operand']
  %s0 = inlined_call_operand.hbm [shape: f32[256,256], index: 0, kind: input, shape index: {}]
  %s1 = inlined_call_operand.hbm [shape: f32[2,1,256], index: 1, kind: output, shape index: {0}]
  %s2 = inlined_call_operand.vmem [shape: f32[2,1,1], index: 2, kind: output, shape index: {1}]
  %s3 = inlined_call_operand.vmem [shape: f32[2,1,1], index: 3, kind: output, shape index: {2}]
  %4 = xla_tuple %s1, %s2, %s3
  %s5 = sld [smem:[#allocation0]]
  $region65: #{tpu_custom_call.1} parent=0
    _
  %s7 = ssub.s32 1, %s5
  %s8 = scalar_select 0, %s7, %s5
  $region1: #{tpu_custom_call.1} parent=0
    #allocation5 [shape = 'u8[262144]{0}', space=vmem, size = 0x40000, scoped, tag = 'input window, operand 0']
    #allocation6 [shape = 's32[2]{0}', space=sflag, size = 0x8, scoped, tag = 'scoped memory for tpu_custom_call.1']
    #allocation7 [shape = 's32[2]{0}', space=sflag, size = 0x8, scoped, tag = 'scoped memory for tpu_custom_call.1']
    #allocation8 [shape = 'u8[2048]{0}', space=vmem, size = 0x800, scoped, tag = 'output window, operand 0']
    %9 = vsyncpa [#allocation6], 0
    %s10 = scalar_lea.sflag [#allocation6], 1
    %11 = vsyncpa %s10, 0
    %12 = vsyncpa [#allocation7], 0
    %s13 = scalar_lea.sflag [#allocation7], 1
    %14 = vsyncpa %s13, 0
    loop: start=0, step=1, limit=4
    $region2: #{tpu_custom_call.1} parent=1 // loop_pre_header
      _
    $region3: #{tpu_custom_call.1} parent=1 // loop_header
      %s16 = sphi 0, %s20
      %p17 = scmp.ge.s32.totalorder %s16, 4
      %s23 = sphi 0, %s35
      %s24 = sphi 0, %s31
      %s25 = sphi 0, %s23
      %s26 = sphi 0, %s24
      %s27 = sphi 0, %s25
      %s28 = sphi 0, %s26
      %s40 = sphi 0, %s42
      %s43 = sphi 0, %s40
      %s44 = sphi 0, %s43
      %s60 = sphi 0, %s44
      %s66 = sphi 0, %s68
      %s69 = sphi 0, %s66
      %s70 = sphi 0, %s69
      %s86 = sphi 0, %s70
      %s92 = sphi 0, %s94
      %s95 = sphi 0, %s92
      %s96 = sphi 0, %s95
      %s112 = sphi 0, %s96
      %s118 = sphi 0, %s120
      %s121 = sphi 0, %s118
      %s122 = sphi 0, %s121
      %s138 = sphi 0, %s122
    $region4: #{tpu_custom_call.1} parent=1 // loop_header_branch
      %19 = sbr.rel (%p17) target = $region8
    $region5: #{tpu_custom_call.1} parent=1 // loop_body
      %s21 = ssub.s32 %s16, 1
      %s22 = ssub.s32 %s16, 2
      %s29 = sadd.s32 1, %s24
      %p30 = scmp.ge.s32.totalorder %s29, 1
      %s31 = scalar_select %p30, 0, %s29
      %s32 = sadd.s32 1, %s23
      %s33 = scalar_select %p30, %s32, %s23
      %p34 = scmp.ge.s32.totalorder %s33, 2
      %s35 = scalar_select %p34, 0, %s33
      %s36 = sadd.s32 %s23, %s24
      %s37 = sadd.s32 %s35, %s31
      %s38 = ssub.s32 %s36, %s37
      %p39 = scmp.eq.s32.totalorder %s38, 0
      %s41 = sadd.s32 %s40, 1
      %s42 = scalar_select %p39, %s40, %s41
      %p45 = pneg %p39
      %p46 = scmp.eq.s32.totalorder %s16, 1
      %p47 = por %p45, %p46
      %p48 = scmp.ne.s32.totalorder %s40, %s43
      %p49 = scmp.eq.s32.totalorder %s16, 0
      %p50 = por %p48, %p49
      %p51 = scmp.ne.s32.totalorder %s40, %s43
      %p52 = scmp.eq.s32.totalorder %s21, 1
      %p53 = por %p51, %p52
      %p54 = scmp.ne.s32.totalorder %s43, %s44
      %p55 = scmp.eq.s32.totalorder %s21, 0
      %p56 = por %p54, %p55
      %p57 = scmp.ne.s32.totalorder %s43, %s44
      %p58 = scmp.eq.s32.totalorder %s22, 1
      %p59 = por %p57, %p58
      %p61 = scmp.ne.s32.totalorder %s44, %s60
      %p62 = scmp.eq.s32.totalorder %s22, 0
      %p63 = por %p61, %p62
      %s64 = ssub.s32 %s23, %s35
      %p65 = scmp.eq.s32.totalorder %s64, 0
      %s67 = sadd.s32 %s66, 1
      %s68 = scalar_select %p65, %s66, %s67
      %p71 = pneg %p65
      %p72 = scmp.eq.s32.totalorder %s16, 1
      %p73 = por %p71, %p72
      %p74 = scmp.ne.s32.totalorder %s66, %s69
      %p75 = scmp.eq.s32.totalorder %s16, 0
      %p76 = por %p74, %p75
      %p77 = scmp.ne.s32.totalorder %s66, %s69
      %p78 = scmp.eq.s32.totalorder %s21, 1
      %p79 = por %p77, %p78
      %p80 = scmp.ne.s32.totalorder %s69, %s70
      %p81 = scmp.eq.s32.totalorder %s21, 0
      %p82 = por %p80, %p81
      %p83 = scmp.ne.s32.totalorder %s69, %s70
      %p84 = scmp.eq.s32.totalorder %s22, 1
      %p85 = por %p83, %p84
      %p87 = scmp.ne.s32.totalorder %s70, %s86
      %p88 = scmp.eq.s32.totalorder %s22, 0
      %p89 = por %p87, %p88
      %s90 = ssub.s32 %s23, %s35
      %p91 = scmp.eq.s32.totalorder %s90, 0
      %s93 = sadd.s32 %s92, 1
      %s94 = scalar_select %p91, %s92, %s93
      %p97 = pneg %p91
      %p98 = scmp.eq.s32.totalorder %s16, 1
      %p99 = por %p97, %p98
      %p100 = scmp.ne.s32.totalorder %s92, %s95
      %p101 = scmp.eq.s32.totalorder %s16, 0
      %p102 = por %p100, %p101
      %p103 = scmp.ne.s32.totalorder %s92, %s95
      %p104 = scmp.eq.s32.totalorder %s21, 1
      %p105 = por %p103, %p104
      %p106 = scmp.ne.s32.totalorder %s95, %s96
      %p107 = scmp.eq.s32.totalorder %s21, 0
      %p108 = por %p106, %p107
      %p109 = scmp.ne.s32.totalorder %s95, %s96
      %p110 = scmp.eq.s32.totalorder %s22, 1
      %p111 = por %p109, %p110
      %p113 = scmp.ne.s32.totalorder %s96, %s112
      %p114 = scmp.eq.s32.totalorder %s22, 0
      %p115 = por %p113, %p114
      %s116 = ssub.s32 %s23, %s35
      %p117 = scmp.eq.s32.totalorder %s116, 0
      %s119 = sadd.s32 %s118, 1
      %s120 = scalar_select %p117, %s118, %s119
      %p123 = pneg %p117
      %p124 = scmp.eq.s32.totalorder %s16, 1
      %p125 = por %p123, %p124
      %p126 = scmp.ne.s32.totalorder %s118, %s121
      %p127 = scmp.eq.s32.totalorder %s16, 0
      %p128 = por %p126, %p127
      %p129 = scmp.ne.s32.totalorder %s118, %s121
      %p130 = scmp.eq.s32.totalorder %s21, 1
      %p131 = por %p129, %p130
      %p132 = scmp.ne.s32.totalorder %s121, %s122
      %p133 = scmp.eq.s32.totalorder %s21, 0
      %p134 = por %p132, %p133
      %p135 = scmp.ne.s32.totalorder %s121, %s122
      %p136 = scmp.eq.s32.totalorder %s22, 1
      %p137 = por %p135, %p136
      %p139 = scmp.ne.s32.totalorder %s122, %s138
      %p140 = scmp.eq.s32.totalorder %s22, 0
      %p141 = por %p139, %p140
      %p142 = scmp.le.s32.totalorder 1, %s16
      %p143 = scmp.lt.s32.totalorder %s16, 3
      %p144 = pnand %p142, %p143
      %p145 = pneg %p144
      // Predicated region
      $region9: #{tpu_custom_call.1} parent=5 // pred_check
        _
      $region10: #{tpu_custom_call.1} parent=5 // pred_check_branch
        %147 = sbr.rel (%p144) target = $region12
      $region11: #{tpu_custom_call.1} parent=5 // pred_region
        %s148 = ssub.s32 %s16, 1
      $region12: #{tpu_custom_call.1} parent=5 // pred_fallthru
        _
      %p149 = scmp.lt.s32.totalorder %s16, 2
      // Predicated region
      $region13: #{tpu_custom_call.1} parent=5 // pred_check
        %p150 = pneg %p149
      $region14: #{tpu_custom_call.1} parent=5 // pred_check_branch
        %152 = sbr.rel (%p150) target = $region16
      $region15: #{tpu_custom_call.1} parent=5 // pred_region
        // Predicated region
        $region17: #{tpu_custom_call.1} parent=15 // pred_check
          %p153 = pneg %p50
        $region18: #{tpu_custom_call.1} parent=15 // pred_check_branch
          %155 = sbr.rel (%p153) target = $region20
        $region19: #{tpu_custom_call.1} parent=15 // pred_region
          %s156 = sand.u32 %s40, 1
          %s157 = scalar_lea.sflag [#allocation6], %s156
          %s158 = sand.u32 %s40, 1
          %s159 = smul.addr %s158, 256
          %s160 = scalar_lea.vmem [#allocation5], %s159
          %s161 = sadd.s32 %s23, %s24
          %s162 = smul.u32 16, %s161
          %s164 = ssub.s32 4096, 4096
          %165 = vsyncadd %s157, %s164
          %s166 = smul.addr %s162, 2
          %s167 = smul.addr %s166, 128
          %s168 = scalar_lea.hbm %s0, %s167
          %s169 = sshll.u32 %s160, 4
          %s170 = int_to_ptr.vmem [resolvable:$true] %s169
          %175 = dma.hbm_to_vmem [thread:$0]  %s168, 4096, %s170, %s157, 256, 256, 16
        $region20: #{tpu_custom_call.1} parent=15 // pred_fallthru
          _
      $region16: #{tpu_custom_call.1} parent=5 // pred_fallthru
        _
      %p176 = scmp.le.s32.totalorder 1, %s16
      %p177 = scmp.lt.s32.totalorder %s16, 3
      %p178 = pnand %p176, %p177
      %p179 = pneg %p178
      // Predicated region
      $region21: #{tpu_custom_call.1} parent=5 // pred_check
        _
      $region22: #{tpu_custom_call.1} parent=5 // pred_check_branch
        %181 = sbr.rel (%p178) target = $region24
      $region23: #{tpu_custom_call.1} parent=5 // pred_region
        %s182 = ssub.s32 %s16, 1
        %s183 = sand.u32 %s43, 1
        %s184 = scalar_lea.sflag [#allocation6], %s183
        %s185 = sand.u32 %s43, 1
        %s186 = smul.addr %s185, 256
        %s187 = scalar_lea.vmem [#allocation5], %s186
        // Predicated region
        $region25: #{tpu_custom_call.1} parent=23 // pred_check
          %p188 = pneg %p56
        $region26: #{tpu_custom_call.1} parent=23 // pred_check_branch
          %190 = sbr.rel (%p188) target = $region28
        $region27: #{tpu_custom_call.1} parent=23 // pred_region
          %191 = dma.done %s184, 4096
        $region28: #{tpu_custom_call.1} parent=23 // pred_fallthru
          _
        %s192 = sand.u32 %s43, 1
        %s193 = scalar_lea.sflag [#allocation6], %s192
        %s194 = sand.u32 %s43, 1
        %s195 = smul.addr %s194, 256
        %s196 = scalar_lea.vmem [#allocation5], %s195
        %p197 = pneg %p56
        %p198 = pneg %p53
        %p199 = pneg %p82
        %p200 = pneg %p79
        %s201 = sand.u32 %s69, 1
        %s202 = scalar_lea.sflag [#allocation7], %s201
        %s203 = sand.u32 %s69, 1
        %s204 = smul.addr %s203, 2
        %s205 = scalar_lea.vmem [#allocation8], %s204
        %p206 = pneg %p108
        %p207 = pneg %p105
        %p208 = scmp.lt.s32.totalorder %s25, 1
        %s209 = scalar_select %p208, %s25, 1
        %s210 = scalar_lea.vmem %s2, %s209
        %p211 = pneg %p134
        %p212 = pneg %p131
        %p213 = scmp.lt.s32.totalorder %s25, 1
        %s214 = scalar_select %p213, %s25, 1
        %s215 = scalar_lea.vmem %s3, %s214
        %s216 = sadd.s32 %s25, %s26
        %s217 = smul.u32 16, %s216
        %p218 = scmp.lt.s32.totalorder %s25, 1
        %s219 = scalar_select %p218, %s25, 1
        %s220 = scalar_lea.vmem %s2, %s219
        %p221 = scmp.lt.s32.totalorder %s25, 1
        %s222 = scalar_select %p221, %s25, 1
        %s223 = scalar_lea.vmem %s3, %s222
        %p224 = scmp.eq.s32.totalorder %s26, 0
        // Predicated region
        $region29: #{tpu_custom_call.1} parent=23 // pred_check
          %p225 = pneg %p224
        $region30: #{tpu_custom_call.1} parent=23 // pred_check_branch
          %227 = sbr.rel (%p225) target = $region32
        $region31: #{tpu_custom_call.1} parent=23 // pred_region
          %v228 = vlaneseq
          %vm229 = vcmp.ge.s32.totalorder %v228, 0
          %vm230 = vcmp.lt.s32.totalorder %v228, 256
          %vm231 = vmand %vm229, %vm230
          %232 = vst.msk [vmem:[#allocation2] sm:$0x3] %vm231, 0.0
          %vm233 = vcmask 0
          %234 = vst.msk [vmem:[#allocation3] sm:$0x1] %vm233, -inf
          %235 = vst.msk [vmem:[#allocation4] sm:$0x1] %vm233, 0.0
        $region32: #{tpu_custom_call.1} parent=23 // pred_fallthru
          _
        %v236 = vld [vmem:[%s187] sm:$0xff]
        %v237 = vld [vmem:[%s187 + $0x8] sm:$0xff]
        %v238 = vld [vmem:[%s187 + $0x10] sm:$0xff]
        %v239 = vld [vmem:[%s187 + $0x18] sm:$0xff]
        %v240 = vld [vmem:[%s187 + $0x20] sm:$0xff]
        %v241 = vld [vmem:[%s187 + $0x28] sm:$0xff]
        %v242 = vld [vmem:[%s187 + $0x30] sm:$0xff]
        %v243 = vld [vmem:[%s187 + $0x38] sm:$0xff]
        %v244 = vld [vmem:[%s187 + $0x40] sm:$0xff]
        %v245 = vld [vmem:[%s187 + $0x48] sm:$0xff]
        %v246 = vld [vmem:[%s187 + $0x50] sm:$0xff]
        %v247 = vld [vmem:[%s187 + $0x58] sm:$0xff]
        %v248 = vld [vmem:[%s187 + $0x60] sm:$0xff]
        %v249 = vld [vmem:[%s187 + $0x68] sm:$0xff]
        %v250 = vld [vmem:[%s187 + $0x70] sm:$0xff]
        %v251 = vld [vmem:[%s187 + $0x78] sm:$0xff]
        %v252 = vld [vmem:[%s187 + $0x80] sm:$0xff]
        %v253 = vld [vmem:[%s187 + $0x88] sm:$0xff]
        %v254 = vld [vmem:[%s187 + $0x90] sm:$0xff]
        %v255 = vld [vmem:[%s187 + $0x98] sm:$0xff]
        %v256 = vld [vmem:[%s187 + $0xa0] sm:$0xff]
        %v257 = vld [vmem:[%s187 + $0xa8] sm:$0xff]
        %v258 = vld [vmem:[%s187 + $0xb0] sm:$0xff]
        %v259 = vld [vmem:[%s187 + $0xb8] sm:$0xff]
        %v260 = vld [vmem:[%s187 + $0xc0] sm:$0xff]
        %v261 = vld [vmem:[%s187 + $0xc8] sm:$0xff]
        %v262 = vld [vmem:[%s187 + $0xd0] sm:$0xff]
        %v263 = vld [vmem:[%s187 + $0xd8] sm:$0xff]
        %v264 = vld [vmem:[%s187 + $0xe0] sm:$0xff]
        %v265 = vld [vmem:[%s187 + $0xe8] sm:$0xff]
        %v266 = vld [vmem:[%s187 + $0xf0] sm:$0xff]
        %v267 = vld [vmem:[%s187 + $0xf8] sm:$0xff]
        %v268 = vmax.f32 %v236, %v237
        %269 = vmax.xlane.f32.xlu0 %v268
        %v270 = vpop.xlane.xlu0 %269
        %v271 = vmax.f32 %v238, %v239
        %272 = vmax.xlane.f32.xlu0 %v271
        %v273 = vpop.xlane.xlu0 %272
        %v274 = vmax.f32 %v240, %v241
        %275 = vmax.xlane.f32.xlu0 %v274
        %v276 = vpop.xlane.xlu0 %275
        %v277 = vmax.f32 %v242, %v243
        %278 = vmax.xlane.f32.xlu0 %v277
        %v279 = vpop.xlane.xlu0 %278
        %v280 = vmax.f32 %v244, %v245
        %281 = vmax.xlane.f32.xlu0 %v280
        %v282 = vpop.xlane.xlu0 %281
        %v283 = vmax.f32 %v246, %v247
        %284 = vmax.xlane.f32.xlu0 %v283
        %v285 = vpop.xlane.xlu0 %284
        %v286 = vmax.f32 %v248, %v249
        %287 = vmax.xlane.f32.xlu0 %v286
        %v288 = vpop.xlane.xlu0 %287
        %v289 = vmax.f32 %v250, %v251
        %290 = vmax.xlane.f32.xlu0 %v289
        %v291 = vpop.xlane.xlu0 %290
        %v292 = vmax.f32 %v252, %v253
        %293 = vmax.xlane.f32.xlu0 %v292
        %v294 = vpop.xlane.xlu0 %293
        %v295 = vmax.f32 %v254, %v255
        %296 = vmax.xlane.f32.xlu0 %v295
        %v297 = vpop.xlane.xlu0 %296
        %v298 = vmax.f32 %v256, %v257
        %299 = vmax.xlane.f32.xlu0 %v298
        %v300 = vpop.xlane.xlu0 %299
        %v301 = vmax.f32 %v258, %v259
        %302 = vmax.xlane.f32.xlu0 %v301
        %v303 = vpop.xlane.xlu0 %302
        %v304 = vmax.f32 %v260, %v261
        %305 = vmax.xlane.f32.xlu0 %v304
        %v306 = vpop.xlane.xlu0 %305
        %v307 = vmax.f32 %v262, %v263
        %308 = vmax.xlane.f32.xlu0 %v307
        %v309 = vpop.xlane.xlu0 %308
        %v310 = vmax.f32 %v264, %v265
        %311 = vmax.xlane.f32.xlu0 %v310
        %v312 = vpop.xlane.xlu0 %311
        %v313 = vmax.f32 %v266, %v267
        %314 = vmax.xlane.f32.xlu0 %v313
        %v315 = vpop.xlane.xlu0 %314
        %v316 = vmul.f32 %v270, 15.0
        %v317 = vmul.f32 %v273, 15.0
        %v318 = vmul.f32 %v276, 15.0
        %v319 = vmul.f32 %v279, 15.0
        %v320 = vmul.f32 %v282, 15.0
        %v321 = vmul.f32 %v285, 15.0
        %v322 = vmul.f32 %v288, 15.0
        %v323 = vmul.f32 %v291, 15.0
        %v324 = vmul.f32 %v294, 15.0
        %v325 = vmul.f32 %v297, 15.0
        %v326 = vmul.f32 %v300, 15.0
        %v327 = vmul.f32 %v303, 15.0
        %v328 = vmul.f32 %v306, 15.0
        %v329 = vmul.f32 %v309, 15.0
        %v330 = vmul.f32 %v312, 15.0
        %v331 = vmul.f32 %v315, 15.0
        %v332 = vmul.f32 %v236, 15.0
        %v333 = vmul.f32 %v237, 15.0
        %v334 = vmul.f32 %v238, 15.0
        %v335 = vmul.f32 %v239, 15.0
        %v336 = vmul.f32 %v240, 15.0
        %v337 = vmul.f32 %v241, 15.0
        %v338 = vmul.f32 %v242, 15.0
        %v339 = vmul.f32 %v243, 15.0
        %v340 = vmul.f32 %v244, 15.0
        %v341 = vmul.f32 %v245, 15.0
        %v342 = vmul.f32 %v246, 15.0
        %v343 = vmul.f32 %v247, 15.0
        %v344 = vmul.f32 %v248, 15.0
        %v345 = vmul.f32 %v249, 15.0
        %v346 = vmul.f32 %v250, 15.0
        %v347 = vmul.f32 %v251, 15.0
        %v348 = vmul.f32 %v252, 15.0
        %v349 = vmul.f32 %v253, 15.0
        %v350 = vmul.f32 %v254, 15.0
        %v351 = vmul.f32 %v255, 15.0
        %v352 = vmul.f32 %v256, 15.0
        %v353 = vmul.f32 %v257, 15.0
        %v354 = vmul.f32 %v258, 15.0
        %v355 = vmul.f32 %v259, 15.0
        %v356 = vmul.f32 %v260, 15.0
        %v357 = vmul.f32 %v261, 15.0
        %v358 = vmul.f32 %v262, 15.0
        %v359 = vmul.f32 %v263, 15.0
        %v360 = vmul.f32 %v264, 15.0
        %v361 = vmul.f32 %v265, 15.0
        %v362 = vmul.f32 %v266, 15.0
        %v363 = vmul.f32 %v267, 15.0
        %v364 = vsub.f32 %v332, %v316
        %v365 = vsub.f32 %v333, %v316
        %v366 = vsub.f32 %v334, %v317
        %v367 = vsub.f32 %v335, %v317
        %v368 = vsub.f32 %v336, %v318
        %v369 = vsub.f32 %v337, %v318
        %v370 = vsub.f32 %v338, %v319
        %v371 = vsub.f32 %v339, %v319
        %v372 = vsub.f32 %v340, %v320
        %v373 = vsub.f32 %v341, %v320
        %v374 = vsub.f32 %v342, %v321
        %v375 = vsub.f32 %v343, %v321
        %v376 = vsub.f32 %v344, %v322
        %v377 = vsub.f32 %v345, %v322
        %v378 = vsub.f32 %v346, %v323
        %v379 = vsub.f32 %v347, %v323
        %v380 = vsub.f32 %v348, %v324
        %v381 = vsub.f32 %v349, %v324
        %v382 = vsub.f32 %v350, %v325
        %v383 = vsub.f32 %v351, %v325
        %v384 = vsub.f32 %v352, %v326
        %v385 = vsub.f32 %v353, %v326
        %v386 = vsub.f32 %v354, %v327
        %v387 = vsub.f32 %v355, %v327
        %v388 = vsub.f32 %v356, %v328
        %v389 = vsub.f32 %v357, %v328
        %v390 = vsub.f32 %v358, %v329
        %v391 = vsub.f32 %v359, %v329
        %v392 = vsub.f32 %v360, %v330
        %v393 = vsub.f32 %v361, %v330
        %v394 = vsub.f32 %v362, %v331
        %v395 = vsub.f32 %v363, %v331
        %v396 = vmul.f32 %v364, 1.442695
        %v397 = vpow.pop %v396
        %v398 = vmul.f32 %v365, 1.442695
        %v399 = vpow.pop %v398
        %v400 = vmul.f32 %v366, 1.442695
        %v401 = vpow.pop %v400
        %v402 = vmul.f32 %v367, 1.442695
        %v403 = vpow.pop %v402
        %v404 = vmul.f32 %v368, 1.442695
        %v405 = vpow.pop %v404
        %v406 = vmul.f32 %v369, 1.442695
        %v407 = vpow.pop %v406
        %v408 = vmul.f32 %v370, 1.442695
        %v409 = vpow.pop %v408
        %v410 = vmul.f32 %v371, 1.442695
        %v411 = vpow.pop %v410
        %v412 = vmul.f32 %v372, 1.442695
        %v413 = vpow.pop %v412
        %v414 = vmul.f32 %v373, 1.442695
        %v415 = vpow.pop %v414
        %v416 = vmul.f32 %v374, 1.442695
        %v417 = vpow.pop %v416
        %v418 = vmul.f32 %v375, 1.442695
        %v419 = vpow.pop %v418
        %v420 = vmul.f32 %v376, 1.442695
        %v421 = vpow.pop %v420
        %v422 = vmul.f32 %v377, 1.442695
        %v423 = vpow.pop %v422
        %v424 = vmul.f32 %v378, 1.442695
        %v425 = vpow.pop %v424
        %v426 = vmul.f32 %v379, 1.442695
        %v427 = vpow.pop %v426
        %v428 = vmul.f32 %v380, 1.442695
        %v429 = vpow.pop %v428
        %v430 = vmul.f32 %v381, 1.442695
        %v431 = vpow.pop %v430
        %v432 = vmul.f32 %v382, 1.442695
        %v433 = vpow.pop %v432
        %v434 = vmul.f32 %v383, 1.442695
        %v435 = vpow.pop %v434
        %v436 = vmul.f32 %v384, 1.442695
        %v437 = vpow.pop %v436
        %v438 = vmul.f32 %v385, 1.442695
        %v439 = vpow.pop %v438
        %v440 = vmul.f32 %v386, 1.442695
        %v441 = vpow.pop %v440
        %v442 = vmul.f32 %v387, 1.442695
        %v443 = vpow.pop %v442
        %v444 = vmul.f32 %v388, 1.442695
        %v445 = vpow.pop %v444
        %v446 = vmul.f32 %v389, 1.442695
        %v447 = vpow.pop %v446
        %v448 = vmul.f32 %v390, 1.442695
        %v449 = vpow.pop %v448
        %v450 = vmul.f32 %v391, 1.442695
        %v451 = vpow.pop %v450
        %v452 = vmul.f32 %v392, 1.442695
        %v453 = vpow.pop %v452
        %v454 = vmul.f32 %v393, 1.442695
        %v455 = vpow.pop %v454
        %v456 = vmul.f32 %v394, 1.442695
        %v457 = vpow.pop %v456
        %v458 = vmul.f32 %v395, 1.442695
        %v459 = vpow.pop %v458
        %v460 = vadd.f32 %v397, %v399
        %461 = vadd.xlane.f32.xlu0 %v460
        %v462 = vpop.xlane.xlu0 %461
        %v463 = vadd.f32 %v401, %v403
        %464 = vadd.xlane.f32.xlu0 %v463
        %v465 = vpop.xlane.xlu0 %464
        %v466 = vadd.f32 %v405, %v407
        %467 = vadd.xlane.f32.xlu0 %v466
        %v468 = vpop.xlane.xlu0 %467
        %v469 = vadd.f32 %v409, %v411
        %470 = vadd.xlane.f32.xlu0 %v469
        %v471 = vpop.xlane.xlu0 %470
        %v472 = vadd.f32 %v413, %v415
        %473 = vadd.xlane.f32.xlu0 %v472
        %v474 = vpop.xlane.xlu0 %473
        %v475 = vadd.f32 %v417, %v419
        %476 = vadd.xlane.f32.xlu0 %v475
        %v477 = vpop.xlane.xlu0 %476
        %v478 = vadd.f32 %v421, %v423
        %479 = vadd.xlane.f32.xlu0 %v478
        %v480 = vpop.xlane.xlu0 %479
        %v481 = vadd.f32 %v425, %v427
        %482 = vadd.xlane.f32.xlu0 %v481
        %v483 = vpop.xlane.xlu0 %482
        %v484 = vadd.f32 %v429, %v431
        %485 = vadd.xlane.f32.xlu0 %v484
        %v486 = vpop.xlane.xlu0 %485
        %v487 = vadd.f32 %v433, %v435
        %488 = vadd.xlane.f32.xlu0 %v487
        %v489 = vpop.xlane.xlu0 %488
        %v490 = vadd.f32 %v437, %v439
        %491 = vadd.xlane.f32.xlu0 %v490
        %v492 = vpop.xlane.xlu0 %491
        %v493 = vadd.f32 %v441, %v443
        %494 = vadd.xlane.f32.xlu0 %v493
        %v495 = vpop.xlane.xlu0 %494
        %v496 = vadd.f32 %v445, %v447
        %497 = vadd.xlane.f32.xlu0 %v496
        %v498 = vpop.xlane.xlu0 %497
        %v499 = vadd.f32 %v449, %v451
        %500 = vadd.xlane.f32.xlu0 %v499
        %v501 = vpop.xlane.xlu0 %500
        %v502 = vadd.f32 %v453, %v455
        %503 = vadd.xlane.f32.xlu0 %v502
        %v504 = vpop.xlane.xlu0 %503
        %v505 = vadd.f32 %v457, %v459
        %506 = vadd.xlane.f32.xlu0 %v505
        %v507 = vpop.xlane.xlu0 %506
        %s508 = sadd.s32 %s25, %s26
        %s509 = smul.u32 %s508, 128
        %s510 = sshra.s32 %s509, 7
        %s511 = sand.u32 %s509, 127
        %s512 = smul.addr %s510, 8
        %s513 = scalar_lea.vmem %s187, %s512 [#allocation5]
        %v514 = vld [vmem:[%s513] sm:$0xff]
        %v515 = vld [vmem:[%s513 + $0x10] sm:$0xff]
        %v516 = vld [vmem:[%s513 + $0x20] sm:$0xff]
        %v517 = vld [vmem:[%s513 + $0x30] sm:$0xff]
        %v518 = vld [vmem:[%s513 + $0x40] sm:$0xff]
        %v519 = vld [vmem:[%s513 + $0x50] sm:$0xff]
        %v520 = vld [vmem:[%s513 + $0x60] sm:$0xff]
        %v521 = vld [vmem:[%s513 + $0x70] sm:$0xff]
        %v522 = vld [vmem:[%s513 + $0x80] sm:$0xff]
        %v523 = vld [vmem:[%s513 + $0x90] sm:$0xff]
        %v524 = vld [vmem:[%s513 + $0xa0] sm:$0xff]
        %v525 = vld [vmem:[%s513 + $0xb0] sm:$0xff]
        %v526 = vld [vmem:[%s513 + $0xc0] sm:$0xff]
        %v527 = vld [vmem:[%s513 + $0xd0] sm:$0xff]
        %v528 = vld [vmem:[%s513 + $0xe0] sm:$0xff]
        %v529 = vld [vmem:[%s513 + $0xf0] sm:$0xff]
        %v530 = vmul.f32 %v514, 15.0
        %v531 = vmul.f32 %v515, 15.0
        %v532 = vmul.f32 %v516, 15.0
        %v533 = vmul.f32 %v517, 15.0
        %v534 = vmul.f32 %v518, 15.0
        %v535 = vmul.f32 %v519, 15.0
        %v536 = vmul.f32 %v520, 15.0
        %v537 = vmul.f32 %v521, 15.0
        %v538 = vmul.f32 %v522, 15.0
        %v539 = vmul.f32 %v523, 15.0
        %v540 = vmul.f32 %v524, 15.0
        %v541 = vmul.f32 %v525, 15.0
        %v542 = vmul.f32 %v526, 15.0
        %v543 = vmul.f32 %v527, 15.0
        %v544 = vmul.f32 %v528, 15.0
        %v545 = vmul.f32 %v529, 15.0
        %v546 = vlaneseq
        %v547 = vshrl.u32 %v546, 7
        %v548 = vadd.s32 %v547, 8
        %v549 = vadd.s32 %v547, 16
        %v550 = vadd.s32 %v547, 24
        %v551 = vadd.s32 %v547, 32
        %v552 = vadd.s32 %v547, 40
        %v553 = vadd.s32 %v547, 48
        %v554 = vadd.s32 %v547, 56
        %v555 = vadd.s32 %v547, 64
        %v556 = vadd.s32 %v547, 72
        %v557 = vadd.s32 %v547, 80
        %v558 = vadd.s32 %v547, 88
        %v559 = vadd.s32 %v547, 96
        %v560 = vadd.s32 %v547, 104
        %v561 = vadd.s32 %v547, 112
        %v562 = vadd.s32 %v547, 120
        %v563 = vlaneseq
        %v564 = vand.u32 %v563, 127
        %vm565 = vcmp.eq.s32.totalorder %v547, %v564
        %vm566 = vcmp.eq.s32.totalorder %v548, %v564
        %vm567 = vcmp.eq.s32.totalorder %v549, %v564
        %vm568 = vcmp.eq.s32.totalorder %v550, %v564
        %vm569 = vcmp.eq.s32.totalorder %v551, %v564
        %vm570 = vcmp.eq.s32.totalorder %v552, %v564
        %vm571 = vcmp.eq.s32.totalorder %v553, %v564
        %vm572 = vcmp.eq.s32.totalorder %v554, %v564
        %vm573 = vcmp.eq.s32.totalorder %v555, %v564
        %vm574 = vcmp.eq.s32.totalorder %v556, %v564
        %vm575 = vcmp.eq.s32.totalorder %v557, %v564
        %vm576 = vcmp.eq.s32.totalorder %v558, %v564
        %vm577 = vcmp.eq.s32.totalorder %v559, %v564
        %vm578 = vcmp.eq.s32.totalorder %v560, %v564
        %vm579 = vcmp.eq.s32.totalorder %v561, %v564
        %vm580 = vcmp.eq.s32.totalorder %v562, %v564
        %v581 = vsel %vm565, %v530, 0.0
        %v582 = vsel %vm566, %v531, 0.0
        %v583 = vsel %vm567, %v532, 0.0
        %v584 = vsel %vm568, %v533, 0.0
        %v585 = vsel %vm569, %v534, 0.0
        %v586 = vsel %vm570, %v535, 0.0
        %v587 = vsel %vm571, %v536, 0.0
        %v588 = vsel %vm572, %v537, 0.0
        %v589 = vsel %vm573, %v538, 0.0
        %v590 = vsel %vm574, %v539, 0.0
        %v591 = vsel %vm575, %v540, 0.0
        %v592 = vsel %vm576, %v541, 0.0
        %v593 = vsel %vm577, %v542, 0.0
        %v594 = vsel %vm578, %v543, 0.0
        %v595 = vsel %vm579, %v544, 0.0
        %v596 = vsel %vm580, %v545, 0.0
        %597 = vadd.xlane.f32.xlu0 %v581
        %v598 = vpop.xlane.xlu0 %597
        %599 = vadd.xlane.f32.xlu0 %v582
        %v600 = vpop.xlane.xlu0 %599
        %601 = vadd.xlane.f32.xlu0 %v583
        %v602 = vpop.xlane.xlu0 %601
        %603 = vadd.xlane.f32.xlu0 %v584
        %v604 = vpop.xlane.xlu0 %603
        %605 = vadd.xlane.f32.xlu0 %v585
        %v606 = vpop.xlane.xlu0 %605
        %607 = vadd.xlane.f32.xlu0 %v586
        %v608 = vpop.xlane.xlu0 %607
        %609 = vadd.xlane.f32.xlu0 %v587
        %v610 = vpop.xlane.xlu0 %609
        %611 = vadd.xlane.f32.xlu0 %v588
        %v612 = vpop.xlane.xlu0 %611
        %613 = vadd.xlane.f32.xlu0 %v589
        %v614 = vpop.xlane.xlu0 %613
        %615 = vadd.xlane.f32.xlu0 %v590
        %v616 = vpop.xlane.xlu0 %615
        %617 = vadd.xlane.f32.xlu0 %v591
        %v618 = vpop.xlane.xlu0 %617
        %619 = vadd.xlane.f32.xlu0 %v592
        %v620 = vpop.xlane.xlu0 %619
        %621 = vadd.xlane.f32.xlu0 %v593
        %v622 = vpop.xlane.xlu0 %621
        %623 = vadd.xlane.f32.xlu0 %v594
        %v624 = vpop.xlane.xlu0 %623
        %625 = vadd.xlane.f32.xlu0 %v595
        %v626 = vpop.xlane.xlu0 %625
        %627 = vadd.xlane.f32.xlu0 %v596
        %v628 = vpop.xlane.xlu0 %627
        %v629 = vld [vmem:[#allocation4] sm:$0x1]
        %v630 = vlog2.pop %v462
        %v631 = vmul.f32 %v630, 0.6931472
        %v632 = vlog2.pop %v465
        %v633 = vmul.f32 %v632, 0.6931472
        %v634 = vlog2.pop %v468
        %v635 = vmul.f32 %v634, 0.6931472
        %v636 = vlog2.pop %v471
        %v637 = vmul.f32 %v636, 0.6931472
        %v638 = vlog2.pop %v474
        %v639 = vmul.f32 %v638, 0.6931472
        %v640 = vlog2.pop %v477
        %v641 = vmul.f32 %v640, 0.6931472
        %v642 = vlog2.pop %v480
        %v643 = vmul.f32 %v642, 0.6931472
        %v644 = vlog2.pop %v483
        %v645 = vmul.f32 %v644, 0.6931472
        %v646 = vlog2.pop %v486
        %v647 = vmul.f32 %v646, 0.6931472
        %v648 = vlog2.pop %v489
        %v649 = vmul.f32 %v648, 0.6931472
        %v650 = vlog2.pop %v492
        %v651 = vmul.f32 %v650, 0.6931472
        %v652 = vlog2.pop %v495
        %v653 = vmul.f32 %v652, 0.6931472
        %v654 = vlog2.pop %v498
        %v655 = vmul.f32 %v654, 0.6931472
        %v656 = vlog2.pop %v501
        %v657 = vmul.f32 %v656, 0.6931472
        %v658 = vlog2.pop %v504
        %v659 = vmul.f32 %v658, 0.6931472
        %v660 = vlog2.pop %v507
        %v661 = vmul.f32 %v660, 0.6931472
        %v662 = vadd.f32 %v631, %v316
        %v663 = vadd.f32 %v633, %v317
        %v664 = vadd.f32 %v635, %v318
        %v665 = vadd.f32 %v637, %v319
        %v666 = vadd.f32 %v639, %v320
        %v667 = vadd.f32 %v641, %v321
        %v668 = vadd.f32 %v643, %v322
        %v669 = vadd.f32 %v645, %v323
        %v670 = vadd.f32 %v647, %v324
        %v671 = vadd.f32 %v649, %v325
        %v672 = vadd.f32 %v651, %v326
        %v673 = vadd.f32 %v653, %v327
        %v674 = vadd.f32 %v655, %v328
        %v675 = vadd.f32 %v657, %v329
        %v676 = vadd.f32 %v659, %v330
        %v677 = vadd.f32 %v661, %v331
        %v678 = vmul.f32 %v598, 2.0
        %v679 = vmul.f32 %v600, 2.0
        %v680 = vmul.f32 %v602, 2.0
        %v681 = vmul.f32 %v604, 2.0
        %v682 = vmul.f32 %v606, 2.0
        %v683 = vmul.f32 %v608, 2.0
        %v684 = vmul.f32 %v610, 2.0
        %v685 = vmul.f32 %v612, 2.0
        %v686 = vmul.f32 %v614, 2.0
        %v687 = vmul.f32 %v616, 2.0
        %v688 = vmul.f32 %v618, 2.0
        %v689 = vmul.f32 %v620, 2.0
        %v690 = vmul.f32 %v622, 2.0
        %v691 = vmul.f32 %v624, 2.0
        %v692 = vmul.f32 %v626, 2.0
        %v693 = vmul.f32 %v628, 2.0
        %v694 = vsub.f32 %v662, %v678
        %v695 = vsub.f32 %v663, %v679
        %v696 = vsub.f32 %v664, %v680
        %v697 = vsub.f32 %v665, %v681
        %v698 = vsub.f32 %v666, %v682
        %v699 = vsub.f32 %v667, %v683
        %v700 = vsub.f32 %v668, %v684
        %v701 = vsub.f32 %v669, %v685
        %v702 = vsub.f32 %v670, %v686
        %v703 = vsub.f32 %v671, %v687
        %v704 = vsub.f32 %v672, %v688
        %v705 = vsub.f32 %v673, %v689
        %v706 = vsub.f32 %v674, %v690
        %v707 = vsub.f32 %v675, %v691
        %v708 = vsub.f32 %v676, %v692
        %v709 = vsub.f32 %v677, %v693
        %v710 = vadd.f32 %v694, 0.0
        %v711 = vadd.f32 %v695, 0.0
        %v712 = vadd.f32 %v696, 0.0
        %v713 = vadd.f32 %v697, 0.0
        %v714 = vadd.f32 %v698, 0.0
        %v715 = vadd.f32 %v699, 0.0
        %v716 = vadd.f32 %v700, 0.0
        %v717 = vadd.f32 %v701, 0.0
        %v718 = vadd.f32 %v702, 0.0
        %v719 = vadd.f32 %v703, 0.0
        %v720 = vadd.f32 %v704, 0.0
        %v721 = vadd.f32 %v705, 0.0
        %v722 = vadd.f32 %v706, 0.0
        %v723 = vadd.f32 %v707, 0.0
        %v724 = vadd.f32 %v708, 0.0
        %v725 = vadd.f32 %v709, 0.0
        %v726 = vadd.f32 %v710, %v711
        %v727 = vadd.f32 %v726, %v712
        %v728 = vadd.f32 %v727, %v713
        %v729 = vadd.f32 %v728, %v714
        %v730 = vadd.f32 %v729, %v715
        %v731 = vadd.f32 %v730, %v716
        %v732 = vadd.f32 %v731, %v717
        %v733 = vadd.f32 %v732, %v718
        %v734 = vadd.f32 %v733, %v719
        %v735 = vadd.f32 %v734, %v720
        %v736 = vadd.f32 %v735, %v721
        %v737 = vadd.f32 %v736, %v722
        %v738 = vadd.f32 %v737, %v723
        %v739 = vadd.f32 %v738, %v724
        %v740 = vadd.f32 %v739, %v725
        %v741 = vrot.slane %v740, 4
        %v742 = vadd.f32 %v740, %v741
        %v743 = vrot.slane %v742, 2
        %v744 = vadd.f32 %v742, %v743
        %v745 = vrot.slane %v744, 1
        %v746 = vadd.f32 %v744, %v745
        %v747 = vadd.f32 %v629, %v746
        %vm748 = vcmask 0
        %749 = vst.msk [vmem:[#allocation4] sm:$0x1] %vm748, %v747
        %v750 = vmax.f32 %v316, %v320
        %v751 = vmax.f32 %v317, %v321
        %v752 = vmax.f32 %v318, %v322
        %v753 = vmax.f32 %v319, %v323
        %v754 = vmax.f32 %v750, %v324
        %v755 = vmax.f32 %v751, %v325
        %v756 = vmax.f32 %v752, %v326
        %v757 = vmax.f32 %v753, %v327
        %v758 = vmax.f32 %v754, %v328
        %v759 = vmax.f32 %v755, %v329
        %v760 = vmax.f32 %v756, %v330
        %v761 = vmax.f32 %v757, %v331
        %v762 = vmax.f32 %v758, %v759
        %v763 = vmax.f32 %v760, %v761
        %v764 = vmax.f32 %v762, %v763
        %v765 = vrot.slane %v764, 4
        %v766 = vmax.f32 %v764, %v765
        %v767 = vrot.slane %v766, 2
        %v768 = vmax.f32 %v766, %v767
        %v769 = vrot.slane %v768, 1
        %v770 = vmax.f32 %v768, %v769
        %v771 = vsub.f32 %v316, %v770
        %v772 = vsub.f32 %v317, %v770
        %v773 = vsub.f32 %v318, %v770
        %v774 = vsub.f32 %v319, %v770
        %v775 = vsub.f32 %v320, %v770
        %v776 = vsub.f32 %v321, %v770
        %v777 = vsub.f32 %v322, %v770
        %v778 = vsub.f32 %v323, %v770
        %v779 = vsub.f32 %v324, %v770
        %v780 = vsub.f32 %v325, %v770
        %v781 = vsub.f32 %v326, %v770
        %v782 = vsub.f32 %v327, %v770
        %v783 = vsub.f32 %v328, %v770
        %v784 = vsub.f32 %v329, %v770
        %v785 = vsub.f32 %v330, %v770
        %v786 = vsub.f32 %v331, %v770
        %v787 = vmul.f32 %v771, 1.442695
        %v788 = vpow.pop %v787
        %v789 = vmul.f32 %v772, 1.442695
        %v790 = vpow.pop %v789
        %v791 = vmul.f32 %v773, 1.442695
        %v792 = vpow.pop %v791
        %v793 = vmul.f32 %v774, 1.442695
        %v794 = vpow.pop %v793
        %v795 = vmul.f32 %v775, 1.442695
        %v796 = vpow.pop %v795
        %v797 = vmul.f32 %v776, 1.442695
        %v798 = vpow.pop %v797
        %v799 = vmul.f32 %v777, 1.442695
        %v800 = vpow.pop %v799
        %v801 = vmul.f32 %v778, 1.442695
        %v802 = vpow.pop %v801
        %v803 = vmul.f32 %v779, 1.442695
        %v804 = vpow.pop %v803
        %v805 = vmul.f32 %v780, 1.442695
        %v806 = vpow.pop %v805
        %v807 = vmul.f32 %v781, 1.442695
        %v808 = vpow.pop %v807
        %v809 = vmul.f32 %v782, 1.442695
        %v810 = vpow.pop %v809
        %v811 = vmul.f32 %v783, 1.442695
        %v812 = vpow.pop %v811
        %v813 = vmul.f32 %v784, 1.442695
        %v814 = vpow.pop %v813
        %v815 = vmul.f32 %v785, 1.442695
        %v816 = vpow.pop %v815
        %v817 = vmul.f32 %v786, 1.442695
        %v818 = vpow.pop %v817
        %v819 = vmul.f32 %v397, %v788
        %v820 = vmul.f32 %v399, %v788
        %v821 = vmul.f32 %v401, %v790
        %v822 = vmul.f32 %v403, %v790
        %v823 = vmul.f32 %v405, %v792
        %v824 = vmul.f32 %v407, %v792
        %v825 = vmul.f32 %v409, %v794
        %v826 = vmul.f32 %v411, %v794
        %v827 = vmul.f32 %v413, %v796
        %v828 = vmul.f32 %v415, %v796
        %v829 = vmul.f32 %v417, %v798
        %v830 = vmul.f32 %v419, %v798
        %v831 = vmul.f32 %v421, %v800
        %v832 = vmul.f32 %v423, %v800
        %v833 = vmul.f32 %v425, %v802
        %v834 = vmul.f32 %v427, %v802
        %v835 = vmul.f32 %v429, %v804
        %v836 = vmul.f32 %v431, %v804
        %v837 = vmul.f32 %v433, %v806
        %v838 = vmul.f32 %v435, %v806
        %v839 = vmul.f32 %v437, %v808
        %v840 = vmul.f32 %v439, %v808
        %v841 = vmul.f32 %v441, %v810
        %v842 = vmul.f32 %v443, %v810
        %v843 = vmul.f32 %v445, %v812
        %v844 = vmul.f32 %v447, %v812
        %v845 = vmul.f32 %v449, %v814
        %v846 = vmul.f32 %v451, %v814
        %v847 = vmul.f32 %v453, %v816
        %v848 = vmul.f32 %v455, %v816
        %v849 = vmul.f32 %v457, %v818
        %v850 = vmul.f32 %v459, %v818
        %v851 = vadd.f32 %v819, %v821
        %v852 = vadd.f32 %v851, %v823
        %v853 = vadd.f32 %v852, %v825
        %v854 = vadd.f32 %v853, %v827
        %v855 = vadd.f32 %v854, %v829
        %v856 = vadd.f32 %v855, %v831
        %v857 = vadd.f32 %v856, %v833
        %v858 = vadd.f32 %v857, %v835
        %v859 = vadd.f32 %v858, %v837
        %v860 = vadd.f32 %v859, %v839
        %v861 = vadd.f32 %v860, %v841
        %v862 = vadd.f32 %v861, %v843
        %v863 = vadd.f32 %v862, %v845
        %v864 = vadd.f32 %v863, %v847
        %v865 = vadd.f32 %v864, %v849
        %v866 = vrot.slane %v865, 4
        %v867 = vadd.f32 %v865, %v866
        %v868 = vrot.slane %v867, 2
        %v869 = vadd.f32 %v867, %v868
        %v870 = vrot.slane %v869, 1
        %v871 = vadd.f32 %v869, %v870
        %v872 = vadd.f32 %v820, %v822
        %v873 = vadd.f32 %v872, %v824
        %v874 = vadd.f32 %v873, %v826
        %v875 = vadd.f32 %v874, %v828
        %v876 = vadd.f32 %v875, %v830
        %v877 = vadd.f32 %v876, %v832
        %v878 = vadd.f32 %v877, %v834
        %v879 = vadd.f32 %v878, %v836
        %v880 = vadd.f32 %v879, %v838
        %v881 = vadd.f32 %v880, %v840
        %v882 = vadd.f32 %v881, %v842
        %v883 = vadd.f32 %v882, %v844
        %v884 = vadd.f32 %v883, %v846
        %v885 = vadd.f32 %v884, %v848
        %v886 = vadd.f32 %v885, %v850
        %v887 = vrot.slane %v886, 4
        %v888 = vadd.f32 %v886, %v887
        %v889 = vrot.slane %v888, 2
        %v890 = vadd.f32 %v888, %v889
        %v891 = vrot.slane %v890, 1
        %v892 = vadd.f32 %v890, %v891
        %v893 = vld [vmem:[#allocation3] sm:$0x1]
        %v894 = vmax.f32 %v893, %v770
        %v895 = vld [vmem:[#allocation2] sm:$0x3]
        %v896 = vsub.f32 %v893, %v894
        %v897 = vmul.f32 %v896, 1.442695
        %v898 = vpow.pop %v897
        %900 = vset.pattern.permute.xlu0 0
        %901 = vperm.xlu0 %900, %v898
        %v902 = vpop.permute.xlu0 %901
        %v904 = vlaneseq
        %v905 = vshrl.u32 %v904, 7
        %v906 = vsub.s32 0, %v905
        %v907 = vrot.slane %v902, %v906
        %v908 = vmul.f32 %v895, %v907
        %v909 = vsub.f32 %v770, %v894
        %v910 = vmul.f32 %v909, 1.442695
        %v911 = vpow.pop %v910
        %913 = vset.pattern.permute.xlu0 0
        %914 = vperm.xlu0 %913, %v911
        %v915 = vpop.permute.xlu0 %914
        %v917 = vlaneseq
        %v918 = vshrl.u32 %v917, 7
        %v919 = vsub.s32 0, %v918
        %v920 = vrot.slane %v915, %v919
        %v921 = vmul.f32 %v871, %v920
        %v922 = vmul.f32 %v892, %v920
        %v925 = vcombine.low %v921, %v922
        %v927 = vunpack.c.l.s4 1966171168
        %v928 = vunpack.c.0.s8 %v927
        %v929 = vlaneseq
        %v930 = vshrl.u32 %v929, 7
        %v931 = vsub.s32 %v928, %v930
        %v932 = vrot.slane %v925, %v931
        %v934 = vunpack.c.l.s4 1966171168
        %v935 = vunpack.c.0.s8 %v934
        %v936 = vlaneseq
        %v937 = vshrl.u32 %v936, 7
        %v938 = vsub.s32 %v935, %v937
        %v939 = vrot.slane %v932, %v938
        %v941 = vadd.f32 %v908, %v939
        %v942 = vlaneseq
        %vm943 = vcmp.ge.s32.totalorder %v942, 0
        %vm944 = vcmp.lt.s32.totalorder %v942, 256
        %vm945 = vmand %vm943, %vm944
        %946 = vst.msk [vmem:[#allocation2] sm:$0x3] %vm945, %v941
        %947 = vst.msk [vmem:[#allocation3] sm:$0x1] %vm748, %v894
        // Predicated region
        $region33: #{tpu_custom_call.1} parent=23 // pred_check
          %p948 = pneg %p224
        $region34: #{tpu_custom_call.1} parent=23 // pred_check_branch
          %950 = sbr.rel (%p948) target = $region36
        $region35: #{tpu_custom_call.1} parent=23 // pred_region
          %v951 = vld [vmem:[#allocation2] sm:$0x3]
          %952 = vst.msk [vmem:[%s205] sm:$0x3] %vm945, %v951
          %v953 = vld [vmem:[#allocation4] sm:$0x1]
          %954 = vst.msk [vmem:[%s220] sm:$0x1] %vm748, %v953
          %v955 = vld [vmem:[#allocation3] sm:$0x1]
          %956 = vst.msk [vmem:[%s223] sm:$0x1] %vm748, %v955
        $region36: #{tpu_custom_call.1} parent=23 // pred_fallthru
          _
        %s957 = sand.u32 %s69, 1
        %s958 = scalar_lea.sflag [#allocation7], %s957
        %s959 = sand.u32 %s69, 1
        %s960 = smul.addr %s959, 2
        %s961 = scalar_lea.vmem [#allocation8], %s960
        %p962 = scmp.lt.s32.totalorder %s25, 1
        %s963 = scalar_select %p962, %s25, 1
        %s964 = scalar_lea.vmem %s2, %s963
        %p965 = scmp.lt.s32.totalorder %s25, 1
        %s966 = scalar_select %p965, %s25, 1
        %s967 = scalar_lea.vmem %s3, %s966
        // Predicated region
        $region37: #{tpu_custom_call.1} parent=23 // pred_check
          %p968 = pneg %p79
        $region38: #{tpu_custom_call.1} parent=23 // pred_check_branch
          %970 = sbr.rel (%p968) target = $region40
        $region39: #{tpu_custom_call.1} parent=23 // pred_region
          %s972 = ssub.s32 32, 32
          %973 = vsyncadd %s958, %s972
          %s974 = smul.addr %s25, 2
          %s975 = smul.addr %s974, 16
          %s976 = scalar_lea.hbm %s1, %s975
          %s978 = sshll.u32 %s961, 4
          %s979 = int_to_ptr.vmem [resolvable:$true] %s978
          %981 = dma.vmem_to_hbm [thread:$0]  %s979, 32, %s976, %s958
        $region40: #{tpu_custom_call.1} parent=23 // pred_fallthru
          _
        // Predicated region
        $region41: #{tpu_custom_call.1} parent=23 // pred_check
          %p982 = pneg %p105
        $region42: #{tpu_custom_call.1} parent=23 // pred_check_branch
          %984 = sbr.rel (%p982) target = $region44
        $region43: #{tpu_custom_call.1} parent=23 // pred_region
          _
        $region44: #{tpu_custom_call.1} parent=23 // pred_fallthru
          _
        // Predicated region
        $region45: #{tpu_custom_call.1} parent=23 // pred_check
          %p985 = pneg %p131
        $region46: #{tpu_custom_call.1} parent=23 // pred_check_branch
          %987 = sbr.rel (%p985) target = $region48
        $region47: #{tpu_custom_call.1} parent=23 // pred_region
          _
        $region48: #{tpu_custom_call.1} parent=23 // pred_fallthru
          _
      $region24: #{tpu_custom_call.1} parent=5 // pred_fallthru
        _
      %p988 = scmp.le.s32.totalorder 2, %s16
      // Predicated region
      $region49: #{tpu_custom_call.1} parent=5 // pred_check
        %p989 = pneg %p988
      $region50: #{tpu_custom_call.1} parent=5 // pred_check_branch
        %991 = sbr.rel (%p989) target = $region52
      $region51: #{tpu_custom_call.1} parent=5 // pred_region
        %s992 = ssub.s32 %s16, 2
        // Predicated region
        $region53: #{tpu_custom_call.1} parent=51 // pred_check
          %p993 = pneg %p85
        $region54: #{tpu_custom_call.1} parent=51 // pred_check_branch
          %995 = sbr.rel (%p993) target = $region56
        $region55: #{tpu_custom_call.1} parent=51 // pred_region
          %s996 = sand.u32 %s70, 1
          %s997 = scalar_lea.sflag [#allocation7], %s996
          %s998 = sand.u32 %s70, 1
          %s999 = smul.addr %s998, 2
          %s1000 = scalar_lea.vmem [#allocation8], %s999
          %1001 = dma.done %s997, 32
        $region56: #{tpu_custom_call.1} parent=51 // pred_fallthru
          _
        // Predicated region
        $region57: #{tpu_custom_call.1} parent=51 // pred_check
          %p1002 = pneg %p111
        $region58: #{tpu_custom_call.1} parent=51 // pred_check_branch
          %1004 = sbr.rel (%p1002) target = $region60
        $region59: #{tpu_custom_call.1} parent=51 // pred_region
          %p1005 = scmp.lt.s32.totalorder %s27, 1
          %s1006 = scalar_select %p1005, %s27, 1
          %s1007 = scalar_lea.vmem %s2, %s1006
        $region60: #{tpu_custom_call.1} parent=51 // pred_fallthru
          _
        // Predicated region
        $region61: #{tpu_custom_call.1} parent=51 // pred_check
          %p1008 = pneg %p137
        $region62: #{tpu_custom_call.1} parent=51 // pred_check_branch
          %1010 = sbr.rel (%p1008) target = $region64
        $region63: #{tpu_custom_call.1} parent=51 // pred_region
          %p1011 = scmp.lt.s32.totalorder %s27, 1
          %s1012 = scalar_select %p1011, %s27, 1
          %s1013 = scalar_lea.vmem %s3, %s1012
        $region64: #{tpu_custom_call.1} parent=51 // pred_fallthru
          _
      $region52: #{tpu_custom_call.1} parent=5 // pred_fallthru
        _
    $region6: #{tpu_custom_call.1} parent=1 // loop_footer
      %s20 = sadd.s32 1, %s16
    $region7: #{tpu_custom_call.1} parent=1 // loop_footer_branch
      %15 = sbr.rel target = $region3
    $region8: #{tpu_custom_call.1} parent=1 // loop_exit
      _
    %1014 = vsyncpa [#allocation6], 1
    %s1015 = scalar_lea.sflag [#allocation6], 1
    %1016 = vsyncpa %s1015, 1
    %1017 = vsyncpa [#allocation7], 1
    %s1018 = scalar_lea.sflag [#allocation7], 1
    %1019 = vsyncpa %s1018, 1

</llo_original>
